<compile_context>
chip_gen: v7x
topology: tpu7x:2x2x1
jax: 0.10.0
libtpu: 0.0.40
codegen_flags: <defaults>
</compile_context>

<pallas_src>
import functools

import jax
import jax.numpy as jnp
from jax.experimental import pallas as pl
from jax.experimental.pallas import tpu as pltpu


def _dwconv3d_kernel(*refs, kt, kh, kw, sh, sw, c, out_h, wc,
                     th, lw, nhs, nws, low_precision):
    """Computes one output time-plane per grid step.

    refs = (x_dt_0, ..., x_dt_{kt-1}, w_fused, b_fused, o)
      x_dt    : (P, Hq, Wq*C)  phase-decomposed padded input plane  t_out*st + dt
      w_fused : (kt*kh*kw, out_w*C) per-lane (channel-tiled) tap weights
      b_fused : (1, out_w*C)        per-lane bias (zeros when module has no bias)
      o       : (out_h, out_w*C)
    """
    x_refs = refs[:kt]
    w_ref = refs[kt]
    b_ref = refs[kt + 1]
    o_ref = refs[kt + 2]

    def compute_block(hs, ws):
        # One (th, lw) output slab accumulated entirely in vregs.
        acc = jnp.zeros((th, lw), jnp.float32)
        for dt in range(kt):
            xr = x_refs[dt]
            for dh in range(kh):
                rh, qh = dh % sh, dh // sh
                for dw in range(kw):
                    rw, qw = dw % sw, dw // sw
                    phase = rh * sw + rw
                    # Dense (unstrided) window read straight from the VMEM ref.
                    win = xr[phase, pl.ds(hs + qh, th), pl.ds(ws + qw * c, lw)]
                    tap = (dt * kh + dh) * kw + dw
                    wv = w_ref[pl.ds(tap, 1), pl.ds(ws, lw)]          # (1, lw)
                    if low_precision:
                        # bf16/f16 multiply on the VPU, f32 accumulate.
                        acc = acc + (win * wv).astype(jnp.float32)
                    else:
                        acc = acc + win.astype(jnp.float32) * wv.astype(jnp.float32)
        res = acc + b_ref[pl.ds(0, 1), pl.ds(ws, lw)].astype(jnp.float32)
        o_ref[pl.ds(hs, th), pl.ds(ws, lw)] = res.astype(o_ref.dtype)

    if nhs == 1 and nws == 1:
        # Fully static fast path (whole plane fits the slab budget).
        compute_block(0, 0)
    else:
        # Slab loops with clamped (overlapping) tail blocks; fori_loop bounds
        # vreg live ranges to one slab.
        def h_body(jh, carry):
            hs = jnp.minimum(jh * th, out_h - th)
            if th % 8 == 0 and out_h % 8 == 0:
                hs = pl.multiple_of(hs, 8)

            def w_body(jw, carry_w):
                ws = jnp.minimum(jw * lw, wc - lw)
                if lw % 128 == 0 and wc % 128 == 0:
                    ws_hint = pl.multiple_of(ws, 128)
                else:
                    ws_hint = ws
                compute_block(hs, ws_hint)
                return carry_w

            jax.lax.fori_loop(0, nws, w_body, 0)
            return carry

        jax.lax.fori_loop(0, nhs, h_body, 0)


@functools.partial(jax.jit, static_argnames=("stride", "padding"))
def depthwise_conv3d(x_ncdhw, weight, bias=None, stride=(1, 1, 1), padding=(0, 0, 0)):
    """Depthwise conv3d matching DepthwiseConv3dFunction.forward semantics.

    x_ncdhw: (N, C, T, H, W), weight: (C, 1, kt, kh, kw), bias: (C,) or None.
    """
    n, c, t, h, w = x_ncdhw.shape
    wc_ch, one_, kt, kh, kw = weight.shape
    assert wc_ch == c and one_ == 1
    st, sh, sw = stride
    pt, ph, pw = padding

    out_t = (t - kt + 2 * pt) // st + 1
    out_h = (h - kh + 2 * ph) // sh + 1
    out_w = (w - kw + 2 * pw) // sw + 1

    # ---- Layout glue (single fused XLA pass): channel-last + pad + phase split.
    hq = out_h + (kh - 1) // sh          # rows per H-phase plane
    wq = out_w + (kw - 1) // sw          # cols per W-phase plane
    h2, w2 = hq * sh, wq * sw            # padded-or-cropped spatial extents
    t_pad = t + 2 * pt
    p = sh * sw
    wqc = wq * c
    wc = out_w * c

    x_cl = jnp.transpose(x_ncdhw, (0, 2, 3, 4, 1))                  # (N,T,H,W,C)
    x_p = jnp.pad(x_cl, ((0, 0), (pt, pt),
                         (ph, max(0, h2 - h - ph)),
                         (pw, max(0, w2 - w - pw)),
                         (0, 0)))
    x_p = x_p[:, :, :h2, :w2, :]
    # Phase decomposition of the spatial strides (free reshape when stride == 1).
    x_p = x_p.reshape(n, t_pad, hq, sh, wq, sw, c)
    x_p = jnp.transpose(x_p, (0, 1, 3, 5, 2, 4, 6))                 # (N,T,sh,sw,Hq,Wq,C)
    x_ph = x_p.reshape(n, t_pad, p, hq, wqc)

    # Per-lane weights / bias, tiled along the fused (W, C) lane axis.
    w_taps = jnp.transpose(weight[:, 0], (1, 2, 3, 0)).reshape(kt * kh * kw, c)
    w_fused = jnp.tile(w_taps, (1, out_w)).astype(x_ncdhw.dtype)    # (taps, out_w*C)
    if bias is None:
        b_fused = jnp.zeros((1, wc), jnp.float32)
    else:
        b_fused = jnp.tile(bias.astype(jnp.float32), out_w).reshape(1, wc)

    # ---- Slab sizes: keep the in-register accumulator around <= 16 vregs.
    th = min(out_h, 16)
    lw = min(wc, 1024)
    nhs = pl.cdiv(out_h, th)
    nws = pl.cdiv(wc, lw)

    low_precision = x_ncdhw.dtype in (jnp.bfloat16, jnp.float16)

    kern = functools.partial(
        _dwconv3d_kernel,
        kt=kt, kh=kh, kw=kw, sh=sh, sw=sw, c=c, out_h=out_h, wc=wc,
        th=th, lw=lw, nhs=nhs, nws=nws, low_precision=low_precision)

    # kt overlapping input time-planes per output plane, via kt specs on the
    # same array (block index along T is an element index since block size 1).
    in_specs = [
        pl.BlockSpec((None, None, p, hq, wqc),
                     (lambda nn, tt, dt=dt: (nn, tt * st + dt, 0, 0, 0)))
        for dt in range(kt)
    ]
    in_specs += [
        pl.BlockSpec((kt * kh * kw, wc), lambda nn, tt: (0, 0)),    # resident weights
        pl.BlockSpec((1, wc), lambda nn, tt: (0, 0)),               # resident bias
    ]
    out_spec = pl.BlockSpec((None, None, out_h, wc), lambda nn, tt: (nn, tt, 0, 0))

    # VMEM budget estimate (double-buffered blocks); only raise the limit if needed.
    itemsize = x_ncdhw.dtype.itemsize
    x_block_bytes = p * hq * wqc * itemsize
    vmem_est = (2 * kt * x_block_bytes
                + 2 * out_h * wc * itemsize
                + 2 * (kt * kh * kw + 1) * wc * 4
                + (2 << 20))
    cp_kwargs = dict(dimension_semantics=("parallel", "parallel"))
    if vmem_est > (32 << 20):
        cp_kwargs["vmem_limit_bytes"] = int(min(vmem_est, 128 << 20))

    out_fused = pl.pallas_call(
        kern,
        out_shape=jax.ShapeDtypeStruct((n, out_t, out_h, wc), x_ncdhw.dtype),
        grid=(n, out_t),
        in_specs=in_specs,
        out_specs=out_spec,
        compiler_params=pltpu.CompilerParams(**cp_kwargs),
    )(*([x_ph] * kt), w_fused, b_fused)

    out = out_fused.reshape(n, out_t, out_h, out_w, c)
    return jnp.transpose(out, (0, 4, 1, 2, 3))                      # back to NCDHW


def _reference_depthwise_conv3d(x, weight, bias, stride, padding):
    """Pure-JAX reference via lax.conv_general_dilated (feature groups)."""
    c = x.shape[1]
    out = jax.lax.conv_general_dilated(
        x, weight,
        window_strides=stride,
        padding=[(p, p) for p in padding],
        dimension_numbers=('NCDHW', 'OIDHW', 'NCDHW'),
        feature_group_count=c,
        precision=jax.lax.Precision.HIGHEST)
    if bias is not None:
        out = out + bias.reshape(1, c, 1, 1, 1)
    return out


if __name__ == "__main__":
    # Module config: DepthwiseConv3d(in_channels=4, kernel_size=3, stride=1,
    #                                padding=1, bias=False)
    N, C, T, H, W = 2, 4, 8, 16, 16
    KT = KH = KW = 3

    key = jax.random.PRNGKey(0)
    kx, kw_, kb = jax.random.split(key, 3)

    x = jax.random.normal(kx, (N, C, T, H, W), dtype=jnp.float32)

    # kaiming_normal_(mode='fan_out', nonlinearity='relu'):
    # fan_out = C * kt*kh*kw, gain = sqrt(2).
    fan_out = C * KT * KH * KW
    std = (2.0 / fan_out) ** 0.5
    weight = std * jax.random.normal(kw_, (C, 1, KT, KH, KW), dtype=jnp.float32)

    # --- Primary check: the module's configuration (bias=False, stride 1, pad 1).
    out = depthwise_conv3d(x, weight, None, stride=(1, 1, 1), padding=(1, 1, 1))
    out = jax.block_until_ready(out)
    ref = _reference_depthwise_conv3d(x, weight, None, (1, 1, 1), (1, 1, 1))
    assert out.shape == (N, C, T, H, W), out.shape
    assert jnp.allclose(out, ref, atol=1e-5, rtol=1e-5), \
        float(jnp.max(jnp.abs(out - ref)))

    # --- Secondary check: stride=2 + bias exercises the phase-decomposition path.
    x2 = jax.random.normal(kx, (N, C, 9, 9, 9), dtype=jnp.float32)
    bias = 0.1 * jax.random.normal(kb, (C,), dtype=jnp.float32)
    out2 = depthwise_conv3d(x2, weight, bias, stride=(2, 2, 2), padding=(1, 1, 1))
    out2 = jax.block_until_ready(out2)
    ref2 = _reference_depthwise_conv3d(x2, weight, bias, (2, 2, 2), (1, 1, 1))
    assert out2.shape == ref2.shape, (out2.shape, ref2.shape)
    assert jnp.allclose(out2, ref2, atol=1e-5, rtol=1e-5), \
        float(jnp.max(jnp.abs(out2 - ref2)))

    print("KERNEL_OK")
</pallas_src>

<mosaic_0001>
module attributes {stable_mosaic.version = 11 : i64} {
  func.func @_dwconv3d_kernel(%arg0: i32, %arg1: i32, %arg2: memref<1x1x1x18x72xf32, #tpu.memory_space<vmem>>, %arg3: memref<1x1x1x18x72xf32, #tpu.memory_space<vmem>>, %arg4: memref<1x1x1x18x72xf32, #tpu.memory_space<vmem>>, %arg5: memref<27x64xf32, #tpu.memory_space<vmem>>, %arg6: memref<1x64xf32, #tpu.memory_space<vmem>>, %arg7: memref<1x1x16x64xf32, #tpu.memory_space<vmem>>) attributes {dimension_semantics = [#tpu.dimension_semantics<parallel>, #tpu.dimension_semantics<parallel>], iteration_bounds = array<i64: 2, 8>, scalar_prefetch = 0 : i64, scratch_operands = 0 : i64, tpu.core_type = #tpu.core_type<tc>, window_params = [{transform_indices = @transform_0, window_bounds = array<i64: 1, 1, 1, 18, 72>}, {transform_indices = @transform_1, window_bounds = array<i64: 1, 1, 1, 18, 72>}, {transform_indices = @transform_2, window_bounds = array<i64: 1, 1, 1, 18, 72>}, {pipeline_mode = #tpu.pipeline_mode<synchronous>, transform_indices = @transform_3, window_bounds = array<i64: 27, 64>}, {pipeline_mode = #tpu.pipeline_mode<synchronous>, transform_indices = @transform_4, window_bounds = array<i64: 1, 64>}, {transform_indices = @transform_5, window_bounds = array<i64: 1, 1, 16, 64>}]} {
    %cst = arith.constant 0.000000e+00 : f32
    %0 = vector.broadcast %cst : f32 to vector<16x64xf32>
    %c0 = arith.constant 0 : index
    %c0_0 = arith.constant 0 : index
    %c0_1 = arith.constant 0 : index
    %c0_2 = arith.constant 0 : index
    %c0_3 = arith.constant 0 : index
    %1 = vector.load %arg2[%c0, %c0_0, %c0_1, %c0_2, %c0_3] : memref<1x1x1x18x72xf32, #tpu.memory_space<vmem>>, vector<1x1x1x16x64xf32>
    %2 = vector.shape_cast %1 : vector<1x1x1x16x64xf32> to vector<16x64xf32>
    %c0_4 = arith.constant 0 : index
    %c0_5 = arith.constant 0 : index
    %3 = vector.load %arg5[%c0_4, %c0_5] : memref<27x64xf32, #tpu.memory_space<vmem>>, vector<1x64xf32>
    %4 = vector.broadcast %3 : vector<1x64xf32> to vector<16x64xf32>
    %5 = arith.mulf %2, %4 : vector<16x64xf32>
    %6 = arith.addf %0, %5 : vector<16x64xf32>
    %c0_6 = arith.constant 0 : index
    %c0_7 = arith.constant 0 : index
    %c0_8 = arith.constant 0 : index
    %c0_9 = arith.constant 0 : index
    %c4 = arith.constant 4 : index
    %7 = vector.load %arg2[%c0_6, %c0_7, %c0_8, %c0_9, %c4] : memref<1x1x1x18x72xf32, #tpu.memory_space<vmem>>, vector<1x1x1x16x64xf32>
    %8 = vector.shape_cast %7 : vector<1x1x1x16x64xf32> to vector<16x64xf32>
    %c1 = arith.constant 1 : index
    %c0_10 = arith.constant 0 : index
    %9 = vector.load %arg5[%c1, %c0_10] : memref<27x64xf32, #tpu.memory_space<vmem>>, vector<1x64xf32>
    %10 = vector.broadcast %9 : vector<1x64xf32> to vector<16x64xf32>
    %11 = arith.mulf %8, %10 : vector<16x64xf32>
    %12 = arith.addf %6, %11 : vector<16x64xf32>
    %c0_11 = arith.constant 0 : index
    %c0_12 = arith.constant 0 : index
    %c0_13 = arith.constant 0 : index
    %c0_14 = arith.constant 0 : index
    %c8 = arith.constant 8 : index
    %13 = vector.load %arg2[%c0_11, %c0_12, %c0_13, %c0_14, %c8] : memref<1x1x1x18x72xf32, #tpu.memory_space<vmem>>, vector<1x1x1x16x64xf32>
    %14 = vector.shape_cast %13 : vector<1x1x1x16x64xf32> to vector<16x64xf32>
    %c2 = arith.constant 2 : index
    %c0_15 = arith.constant 0 : index
    %15 = vector.load %arg5[%c2, %c0_15] : memref<27x64xf32, #tpu.memory_space<vmem>>, vector<1x64xf32>
    %16 = vector.broadcast %15 : vector<1x64xf32> to vector<16x64xf32>
    %17 = arith.mulf %14, %16 : vector<16x64xf32>
    %18 = arith.addf %12, %17 : vector<16x64xf32>
    %c0_16 = arith.constant 0 : index
    %c0_17 = arith.constant 0 : index
    %c0_18 = arith.constant 0 : index
    %c1_19 = arith.constant 1 : index
    %c0_20 = arith.constant 0 : index
    %19 = vector.load %arg2[%c0_16, %c0_17, %c0_18, %c1_19, %c0_20] : memref<1x1x1x18x72xf32, #tpu.memory_space<vmem>>, vector<1x1x1x16x64xf32>
    %20 = vector.shape_cast %19 : vector<1x1x1x16x64xf32> to vector<16x64xf32>
    %c3 = arith.constant 3 : index
    %c0_21 = arith.constant 0 : index
    %21 = vector.load %arg5[%c3, %c0_21] : memref<27x64xf32, #tpu.memory_space<vmem>>, vector<1x64xf32>
    %22 = vector.broadcast %21 : vector<1x64xf32> to vector<16x64xf32>
    %23 = arith.mulf %20, %22 : vector<16x64xf32>
    %24 = arith.addf %18, %23 : vector<16x64xf32>
    %c0_22 = arith.constant 0 : index
    %c0_23 = arith.constant 0 : index
    %c0_24 = arith.constant 0 : index
    %c1_25 = arith.constant 1 : index
    %c4_26 = arith.constant 4 : index
    %25 = vector.load %arg2[%c0_22, %c0_23, %c0_24, %c1_25, %c4_26] : memref<1x1x1x18x72xf32, #tpu.memory_space<vmem>>, vector<1x1x1x16x64xf32>
    %26 = vector.shape_cast %25 : vector<1x1x1x16x64xf32> to vector<16x64xf32>
    %c4_27 = arith.constant 4 : index
    %c0_28 = arith.constant 0 : index
    %27 = vector.load %arg5[%c4_27, %c0_28] : memref<27x64xf32, #tpu.memory_space<vmem>>, vector<1x64xf32>
    %28 = vector.broadcast %27 : vector<1x64xf32> to vector<16x64xf32>
    %29 = arith.mulf %26, %28 : vector<16x64xf32>
    %30 = arith.addf %24, %29 : vector<16x64xf32>
    %c0_29 = arith.constant 0 : index
    %c0_30 = arith.constant 0 : index
    %c0_31 = arith.constant 0 : index
    %c1_32 = arith.constant 1 : index
    %c8_33 = arith.constant 8 : index
    %31 = vector.load %arg2[%c0_29, %c0_30, %c0_31, %c1_32, %c8_33] : memref<1x1x1x18x72xf32, #tpu.memory_space<vmem>>, vector<1x1x1x16x64xf32>
    %32 = vector.shape_cast %31 : vector<1x1x1x16x64xf32> to vector<16x64xf32>
    %c5 = arith.constant 5 : index
    %c0_34 = arith.constant 0 : index
    %33 = vector.load %arg5[%c5, %c0_34] : memref<27x64xf32, #tpu.memory_space<vmem>>, vector<1x64xf32>
    %34 = vector.broadcast %33 : vector<1x64xf32> to vector<16x64xf32>
    %35 = arith.mulf %32, %34 : vector<16x64xf32>
    %36 = arith.addf %30, %35 : vector<16x64xf32>
    %c0_35 = arith.constant 0 : index
    %c0_36 = arith.constant 0 : index
    %c0_37 = arith.constant 0 : index
    %c2_38 = arith.constant 2 : index
    %c0_39 = arith.constant 0 : index
    %37 = vector.load %arg2[%c0_35, %c0_36, %c0_37, %c2_38, %c0_39] : memref<1x1x1x18x72xf32, #tpu.memory_space<vmem>>, vector<1x1x1x16x64xf32>
    %38 = vector.shape_cast %37 : vector<1x1x1x16x64xf32> to vector<16x64xf32>
    %c6 = arith.constant 6 : index
    %c0_40 = arith.constant 0 : index
    %39 = vector.load %arg5[%c6, %c0_40] : memref<27x64xf32, #tpu.memory_space<vmem>>, vector<1x64xf32>
    %40 = vector.broadcast %39 : vector<1x64xf32> to vector<16x64xf32>
    %41 = arith.mulf %38, %40 : vector<16x64xf32>
    %42 = arith.addf %36, %41 : vector<16x64xf32>
    %c0_41 = arith.constant 0 : index
    %c0_42 = arith.constant 0 : index
    %c0_43 = arith.constant 0 : index
    %c2_44 = arith.constant 2 : index
    %c4_45 = arith.constant 4 : index
    %43 = vector.load %arg2[%c0_41, %c0_42, %c0_43, %c2_44, %c4_45] : memref<1x1x1x18x72xf32, #tpu.memory_space<vmem>>, vector<1x1x1x16x64xf32>
    %44 = vector.shape_cast %43 : vector<1x1x1x16x64xf32> to vector<16x64xf32>
    %c7 = arith.constant 7 : index
    %c0_46 = arith.constant 0 : index
    %45 = vector.load %arg5[%c7, %c0_46] : memref<27x64xf32, #tpu.memory_space<vmem>>, vector<1x64xf32>
    %46 = vector.broadcast %45 : vector<1x64xf32> to vector<16x64xf32>
    %47 = arith.mulf %44, %46 : vector<16x64xf32>
    %48 = arith.addf %42, %47 : vector<16x64xf32>
    %c0_47 = arith.constant 0 : index
    %c0_48 = arith.constant 0 : index
    %c0_49 = arith.constant 0 : index
    %c2_50 = arith.constant 2 : index
    %c8_51 = arith.constant 8 : index
    %49 = vector.load %arg2[%c0_47, %c0_48, %c0_49, %c2_50, %c8_51] : memref<1x1x1x18x72xf32, #tpu.memory_space<vmem>>, vector<1x1x1x16x64xf32>
    %50 = vector.shape_cast %49 : vector<1x1x1x16x64xf32> to vector<16x64xf32>
    %c8_52 = arith.constant 8 : index
    %c0_53 = arith.constant 0 : index
    %51 = vector.load %arg5[%c8_52, %c0_53] : memref<27x64xf32, #tpu.memory_space<vmem>>, vector<1x64xf32>
    %52 = vector.broadcast %51 : vector<1x64xf32> to vector<16x64xf32>
    %53 = arith.mulf %50, %52 : vector<16x64xf32>
    %54 = arith.addf %48, %53 : vector<16x64xf32>
    %c0_54 = arith.constant 0 : index
    %c0_55 = arith.constant 0 : index
    %c0_56 = arith.constant 0 : index
    %c0_57 = arith.constant 0 : index
    %c0_58 = arith.constant 0 : index
    %55 = vector.load %arg3[%c0_54, %c0_55, %c0_56, %c0_57, %c0_58] : memref<1x1x1x18x72xf32, #tpu.memory_space<vmem>>, vector<1x1x1x16x64xf32>
    %56 = vector.shape_cast %55 : vector<1x1x1x16x64xf32> to vector<16x64xf32>
    %c9 = arith.constant 9 : index
    %c0_59 = arith.constant 0 : index
    %57 = vector.load %arg5[%c9, %c0_59] : memref<27x64xf32, #tpu.memory_space<vmem>>, vector<1x64xf32>
    %58 = vector.broadcast %57 : vector<1x64xf32> to vector<16x64xf32>
    %59 = arith.mulf %56, %58 : vector<16x64xf32>
    %60 = arith.addf %54, %59 : vector<16x64xf32>
    %c0_60 = arith.constant 0 : index
    %c0_61 = arith.constant 0 : index
    %c0_62 = arith.constant 0 : index
    %c0_63 = arith.constant 0 : index
    %c4_64 = arith.constant 4 : index
    %61 = vector.load %arg3[%c0_60, %c0_61, %c0_62, %c0_63, %c4_64] : memref<1x1x1x18x72xf32, #tpu.memory_space<vmem>>, vector<1x1x1x16x64xf32>
    %62 = vector.shape_cast %61 : vector<1x1x1x16x64xf32> to vector<16x64xf32>
    %c10 = arith.constant 10 : index
    %c0_65 = arith.constant 0 : index
    %63 = vector.load %arg5[%c10, %c0_65] : memref<27x64xf32, #tpu.memory_space<vmem>>, vector<1x64xf32>
    %64 = vector.broadcast %63 : vector<1x64xf32> to vector<16x64xf32>
    %65 = arith.mulf %62, %64 : vector<16x64xf32>
    %66 = arith.addf %60, %65 : vector<16x64xf32>
    %c0_66 = arith.constant 0 : index
    %c0_67 = arith.constant 0 : index
    %c0_68 = arith.constant 0 : index
    %c0_69 = arith.constant 0 : index
    %c8_70 = arith.constant 8 : index
    %67 = vector.load %arg3[%c0_66, %c0_67, %c0_68, %c0_69, %c8_70] : memref<1x1x1x18x72xf32, #tpu.memory_space<vmem>>, vector<1x1x1x16x64xf32>
    %68 = vector.shape_cast %67 : vector<1x1x1x16x64xf32> to vector<16x64xf32>
    %c11 = arith.constant 11 : index
    %c0_71 = arith.constant 0 : index
    %69 = vector.load %arg5[%c11, %c0_71] : memref<27x64xf32, #tpu.memory_space<vmem>>, vector<1x64xf32>
    %70 = vector.broadcast %69 : vector<1x64xf32> to vector<16x64xf32>
    %71 = arith.mulf %68, %70 : vector<16x64xf32>
    %72 = arith.addf %66, %71 : vector<16x64xf32>
    %c0_72 = arith.constant 0 : index
    %c0_73 = arith.constant 0 : index
    %c0_74 = arith.constant 0 : index
    %c1_75 = arith.constant 1 : index
    %c0_76 = arith.constant 0 : index
    %73 = vector.load %arg3[%c0_72, %c0_73, %c0_74, %c1_75, %c0_76] : memref<1x1x1x18x72xf32, #tpu.memory_space<vmem>>, vector<1x1x1x16x64xf32>
    %74 = vector.shape_cast %73 : vector<1x1x1x16x64xf32> to vector<16x64xf32>
    %c12 = arith.constant 12 : index
    %c0_77 = arith.constant 0 : index
    %75 = vector.load %arg5[%c12, %c0_77] : memref<27x64xf32, #tpu.memory_space<vmem>>, vector<1x64xf32>
    %76 = vector.broadcast %75 : vector<1x64xf32> to vector<16x64xf32>
    %77 = arith.mulf %74, %76 : vector<16x64xf32>
    %78 = arith.addf %72, %77 : vector<16x64xf32>
    %c0_78 = arith.constant 0 : index
    %c0_79 = arith.constant 0 : index
    %c0_80 = arith.constant 0 : index
    %c1_81 = arith.constant 1 : index
    %c4_82 = arith.constant 4 : index
    %79 = vector.load %arg3[%c0_78, %c0_79, %c0_80, %c1_81, %c4_82] : memref<1x1x1x18x72xf32, #tpu.memory_space<vmem>>, vector<1x1x1x16x64xf32>
    %80 = vector.shape_cast %79 : vector<1x1x1x16x64xf32> to vector<16x64xf32>
    %c13 = arith.constant 13 : index
    %c0_83 = arith.constant 0 : index
    %81 = vector.load %arg5[%c13, %c0_83] : memref<27x64xf32, #tpu.memory_space<vmem>>, vector<1x64xf32>
    %82 = vector.broadcast %81 : vector<1x64xf32> to vector<16x64xf32>
    %83 = arith.mulf %80, %82 : vector<16x64xf32>
    %84 = arith.addf %78, %83 : vector<16x64xf32>
    %c0_84 = arith.constant 0 : index
    %c0_85 = arith.constant 0 : index
    %c0_86 = arith.constant 0 : index
    %c1_87 = arith.constant 1 : index
    %c8_88 = arith.constant 8 : index
    %85 = vector.load %arg3[%c0_84, %c0_85, %c0_86, %c1_87, %c8_88] : memref<1x1x1x18x72xf32, #tpu.memory_space<vmem>>, vector<1x1x1x16x64xf32>
    %86 = vector.shape_cast %85 : vector<1x1x1x16x64xf32> to vector<16x64xf32>
    %c14 = arith.constant 14 : index
    %c0_89 = arith.constant 0 : index
    %87 = vector.load %arg5[%c14, %c0_89] : memref<27x64xf32, #tpu.memory_space<vmem>>, vector<1x64xf32>
    %88 = vector.broadcast %87 : vector<1x64xf32> to vector<16x64xf32>
    %89 = arith.mulf %86, %88 : vector<16x64xf32>
    %90 = arith.addf %84, %89 : vector<16x64xf32>
    %c0_90 = arith.constant 0 : index
    %c0_91 = arith.constant 0 : index
    %c0_92 = arith.constant 0 : index
    %c2_93 = arith.constant 2 : index
    %c0_94 = arith.constant 0 : index
    %91 = vector.load %arg3[%c0_90, %c0_91, %c0_92, %c2_93, %c0_94] : memref<1x1x1x18x72xf32, #tpu.memory_space<vmem>>, vector<1x1x1x16x64xf32>
    %92 = vector.shape_cast %91 : vector<1x1x1x16x64xf32> to vector<16x64xf32>
    %c15 = arith.constant 15 : index
    %c0_95 = arith.constant 0 : index
    %93 = vector.load %arg5[%c15, %c0_95] : memref<27x64xf32, #tpu.memory_space<vmem>>, vector<1x64xf32>
    %94 = vector.broadcast %93 : vector<1x64xf32> to vector<16x64xf32>
    %95 = arith.mulf %92, %94 : vector<16x64xf32>
    %96 = arith.addf %90, %95 : vector<16x64xf32>
    %c0_96 = arith.constant 0 : index
    %c0_97 = arith.constant 0 : index
    %c0_98 = arith.constant 0 : index
    %c2_99 = arith.constant 2 : index
    %c4_100 = arith.constant 4 : index
    %97 = vector.load %arg3[%c0_96, %c0_97, %c0_98, %c2_99, %c4_100] : memref<1x1x1x18x72xf32, #tpu.memory_space<vmem>>, vector<1x1x1x16x64xf32>
    %98 = vector.shape_cast %97 : vector<1x1x1x16x64xf32> to vector<16x64xf32>
    %c16 = arith.constant 16 : index
    %c0_101 = arith.constant 0 : index
    %99 = vector.load %arg5[%c16, %c0_101] : memref<27x64xf32, #tpu.memory_space<vmem>>, vector<1x64xf32>
    %100 = vector.broadcast %99 : vector<1x64xf32> to vector<16x64xf32>
    %101 = arith.mulf %98, %100 : vector<16x64xf32>
    %102 = arith.addf %96, %101 : vector<16x64xf32>
    %c0_102 = arith.constant 0 : index
    %c0_103 = arith.constant 0 : index
    %c0_104 = arith.constant 0 : index
    %c2_105 = arith.constant 2 : index
    %c8_106 = arith.constant 8 : index
    %103 = vector.load %arg3[%c0_102, %c0_103, %c0_104, %c2_105, %c8_106] : memref<1x1x1x18x72xf32, #tpu.memory_space<vmem>>, vector<1x1x1x16x64xf32>
    %104 = vector.shape_cast %103 : vector<1x1x1x16x64xf32> to vector<16x64xf32>
    %c17 = arith.constant 17 : index
    %c0_107 = arith.constant 0 : index
    %105 = vector.load %arg5[%c17, %c0_107] : memref<27x64xf32, #tpu.memory_space<vmem>>, vector<1x64xf32>
    %106 = vector.broadcast %105 : vector<1x64xf32> to vector<16x64xf32>
    %107 = arith.mulf %104, %106 : vector<16x64xf32>
    %108 = arith.addf %102, %107 : vector<16x64xf32>
    %c0_108 = arith.constant 0 : index
    %c0_109 = arith.constant 0 : index
    %c0_110 = arith.constant 0 : index
    %c0_111 = arith.constant 0 : index
    %c0_112 = arith.constant 0 : index
    %109 = vector.load %arg4[%c0_108, %c0_109, %c0_110, %c0_111, %c0_112] : memref<1x1x1x18x72xf32, #tpu.memory_space<vmem>>, vector<1x1x1x16x64xf32>
    %110 = vector.shape_cast %109 : vector<1x1x1x16x64xf32> to vector<16x64xf32>
    %c18 = arith.constant 18 : index
    %c0_113 = arith.constant 0 : index
    %111 = vector.load %arg5[%c18, %c0_113] : memref<27x64xf32, #tpu.memory_space<vmem>>, vector<1x64xf32>
    %112 = vector.broadcast %111 : vector<1x64xf32> to vector<16x64xf32>
    %113 = arith.mulf %110, %112 : vector<16x64xf32>
    %114 = arith.addf %108, %113 : vector<16x64xf32>
    %c0_114 = arith.constant 0 : index
    %c0_115 = arith.constant 0 : index
    %c0_116 = arith.constant 0 : index
    %c0_117 = arith.constant 0 : index
    %c4_118 = arith.constant 4 : index
    %115 = vector.load %arg4[%c0_114, %c0_115, %c0_116, %c0_117, %c4_118] : memref<1x1x1x18x72xf32, #tpu.memory_space<vmem>>, vector<1x1x1x16x64xf32>
    %116 = vector.shape_cast %115 : vector<1x1x1x16x64xf32> to vector<16x64xf32>
    %c19 = arith.constant 19 : index
    %c0_119 = arith.constant 0 : index
    %117 = vector.load %arg5[%c19, %c0_119] : memref<27x64xf32, #tpu.memory_space<vmem>>, vector<1x64xf32>
    %118 = vector.broadcast %117 : vector<1x64xf32> to vector<16x64xf32>
    %119 = arith.mulf %116, %118 : vector<16x64xf32>
    %120 = arith.addf %114, %119 : vector<16x64xf32>
    %c0_120 = arith.constant 0 : index
    %c0_121 = arith.constant 0 : index
    %c0_122 = arith.constant 0 : index
    %c0_123 = arith.constant 0 : index
    %c8_124 = arith.constant 8 : index
    %121 = vector.load %arg4[%c0_120, %c0_121, %c0_122, %c0_123, %c8_124] : memref<1x1x1x18x72xf32, #tpu.memory_space<vmem>>, vector<1x1x1x16x64xf32>
    %122 = vector.shape_cast %121 : vector<1x1x1x16x64xf32> to vector<16x64xf32>
    %c20 = arith.constant 20 : index
    %c0_125 = arith.constant 0 : index
    %123 = vector.load %arg5[%c20, %c0_125] : memref<27x64xf32, #tpu.memory_space<vmem>>, vector<1x64xf32>
    %124 = vector.broadcast %123 : vector<1x64xf32> to vector<16x64xf32>
    %125 = arith.mulf %122, %124 : vector<16x64xf32>
    %126 = arith.addf %120, %125 : vector<16x64xf32>
    %c0_126 = arith.constant 0 : index
    %c0_127 = arith.constant 0 : index
    %c0_128 = arith.constant 0 : index
    %c1_129 = arith.constant 1 : index
    %c0_130 = arith.constant 0 : index
    %127 = vector.load %arg4[%c0_126, %c0_127, %c0_128, %c1_129, %c0_130] : memref<1x1x1x18x72xf32, #tpu.memory_space<vmem>>, vector<1x1x1x16x64xf32>
    %128 = vector.shape_cast %127 : vector<1x1x1x16x64xf32> to vector<16x64xf32>
    %c21 = arith.constant 21 : index
    %c0_131 = arith.constant 0 : index
    %129 = vector.load %arg5[%c21, %c0_131] : memref<27x64xf32, #tpu.memory_space<vmem>>, vector<1x64xf32>
    %130 = vector.broadcast %129 : vector<1x64xf32> to vector<16x64xf32>
    %131 = arith.mulf %128, %130 : vector<16x64xf32>
    %132 = arith.addf %126, %131 : vector<16x64xf32>
    %c0_132 = arith.constant 0 : index
    %c0_133 = arith.constant 0 : index
    %c0_134 = arith.constant 0 : index
    %c1_135 = arith.constant 1 : index
    %c4_136 = arith.constant 4 : index
    %133 = vector.load %arg4[%c0_132, %c0_133, %c0_134, %c1_135, %c4_136] : memref<1x1x1x18x72xf32, #tpu.memory_space<vmem>>, vector<1x1x1x16x64xf32>
    %134 = vector.shape_cast %133 : vector<1x1x1x16x64xf32> to vector<16x64xf32>
    %c22 = arith.constant 22 : index
    %c0_137 = arith.constant 0 : index
    %135 = vector.load %arg5[%c22, %c0_137] : memref<27x64xf32, #tpu.memory_space<vmem>>, vector<1x64xf32>
    %136 = vector.broadcast %135 : vector<1x64xf32> to vector<16x64xf32>
    %137 = arith.mulf %134, %136 : vector<16x64xf32>
    %138 = arith.addf %132, %137 : vector<16x64xf32>
    %c0_138 = arith.constant 0 : index
    %c0_139 = arith.constant 0 : index
    %c0_140 = arith.constant 0 : index
    %c1_141 = arith.constant 1 : index
    %c8_142 = arith.constant 8 : index
    %139 = vector.load %arg4[%c0_138, %c0_139, %c0_140, %c1_141, %c8_142] : memref<1x1x1x18x72xf32, #tpu.memory_space<vmem>>, vector<1x1x1x16x64xf32>
    %140 = vector.shape_cast %139 : vector<1x1x1x16x64xf32> to vector<16x64xf32>
    %c23 = arith.constant 23 : index
    %c0_143 = arith.constant 0 : index
    %141 = vector.load %arg5[%c23, %c0_143] : memref<27x64xf32, #tpu.memory_space<vmem>>, vector<1x64xf32>
    %142 = vector.broadcast %141 : vector<1x64xf32> to vector<16x64xf32>
    %143 = arith.mulf %140, %142 : vector<16x64xf32>
    %144 = arith.addf %138, %143 : vector<16x64xf32>
    %c0_144 = arith.constant 0 : index
    %c0_145 = arith.constant 0 : index
    %c0_146 = arith.constant 0 : index
    %c2_147 = arith.constant 2 : index
    %c0_148 = arith.constant 0 : index
    %145 = vector.load %arg4[%c0_144, %c0_145, %c0_146, %c2_147, %c0_148] : memref<1x1x1x18x72xf32, #tpu.memory_space<vmem>>, vector<1x1x1x16x64xf32>
    %146 = vector.shape_cast %145 : vector<1x1x1x16x64xf32> to vector<16x64xf32>
    %c24 = arith.constant 24 : index
    %c0_149 = arith.constant 0 : index
    %147 = vector.load %arg5[%c24, %c0_149] : memref<27x64xf32, #tpu.memory_space<vmem>>, vector<1x64xf32>
    %148 = vector.broadcast %147 : vector<1x64xf32> to vector<16x64xf32>
    %149 = arith.mulf %146, %148 : vector<16x64xf32>
    %150 = arith.addf %144, %149 : vector<16x64xf32>
    %c0_150 = arith.constant 0 : index
    %c0_151 = arith.constant 0 : index
    %c0_152 = arith.constant 0 : index
    %c2_153 = arith.constant 2 : index
    %c4_154 = arith.constant 4 : index
    %151 = vector.load %arg4[%c0_150, %c0_151, %c0_152, %c2_153, %c4_154] : memref<1x1x1x18x72xf32, #tpu.memory_space<vmem>>, vector<1x1x1x16x64xf32>
    %152 = vector.shape_cast %151 : vector<1x1x1x16x64xf32> to vector<16x64xf32>
    %c25 = arith.constant 25 : index
    %c0_155 = arith.constant 0 : index
    %153 = vector.load %arg5[%c25, %c0_155] : memref<27x64xf32, #tpu.memory_space<vmem>>, vector<1x64xf32>
    %154 = vector.broadcast %153 : vector<1x64xf32> to vector<16x64xf32>
    %155 = arith.mulf %152, %154 : vector<16x64xf32>
    %156 = arith.addf %150, %155 : vector<16x64xf32>
    %c0_156 = arith.constant 0 : index
    %c0_157 = arith.constant 0 : index
    %c0_158 = arith.constant 0 : index
    %c2_159 = arith.constant 2 : index
    %c8_160 = arith.constant 8 : index
    %157 = vector.load %arg4[%c0_156, %c0_157, %c0_158, %c2_159, %c8_160] : memref<1x1x1x18x72xf32, #tpu.memory_space<vmem>>, vector<1x1x1x16x64xf32>
    %158 = vector.shape_cast %157 : vector<1x1x1x16x64xf32> to vector<16x64xf32>
    %c26 = arith.constant 26 : index
    %c0_161 = arith.constant 0 : index
    %159 = vector.load %arg5[%c26, %c0_161] : memref<27x64xf32, #tpu.memory_space<vmem>>, vector<1x64xf32>
    %160 = vector.broadcast %159 : vector<1x64xf32> to vector<16x64xf32>
    %161 = arith.mulf %158, %160 : vector<16x64xf32>
    %162 = arith.addf %156, %161 : vector<16x64xf32>
    %c0_162 = arith.constant 0 : index
    %c0_163 = arith.constant 0 : index
    %163 = vector.load %arg6[%c0_162, %c0_163] : memref<1x64xf32, #tpu.memory_space<vmem>>, vector<1x64xf32>
    %164 = vector.broadcast %163 : vector<1x64xf32> to vector<16x64xf32>
    %165 = arith.addf %162, %164 : vector<16x64xf32>
    %c0_164 = arith.constant 0 : index
    %c0_165 = arith.constant 0 : index
    %c0_166 = arith.constant 0 : index
    %c0_167 = arith.constant 0 : index
    %166 = vector.load %arg7[%c0_164, %c0_165, %c0_166, %c0_167] : memref<1x1x16x64xf32, #tpu.memory_space<vmem>>, vector<1x1x16x64xf32>
    %167 = vector.shape_cast %166 : vector<1x1x16x64xf32> to vector<16x64xf32>
    %168 = vector.shape_cast %165 : vector<16x64xf32> to vector<1x1x16x64xf32>
    tpu.vector_store %arg7[%c0_164, %c0_165, %c0_166, %c0_167], %168 {strides = array<i32>} : memref<1x1x16x64xf32, #tpu.memory_space<vmem>>, vector<1x1x16x64xf32>,
    return
  }
  func.func @transform_0(%arg0: i32, %arg1: i32) -> (i32, i32, i32, i32, i32) {
    %c1_i32 = arith.constant 1 : i32
    %0 = arith.muli %arg1, %c1_i32 : i32
    %c0_i32 = arith.constant 0 : i32
    %1 = arith.addi %0, %c0_i32 : i32
    %c0_i32_0 = arith.constant 0 : i32
    %c0_i32_1 = arith.constant 0 : i32
    %c0_i32_2 = arith.constant 0 : i32
    %c0_i32_3 = arith.constant 0 : i32
    return %arg0, %1, %c0_i32_0, %c0_i32_1, %c0_i32_2 : i32, i32, i32, i32, i32
  }
  func.func @transform_1(%arg0: i32, %arg1: i32) -> (i32, i32, i32, i32, i32) {
    %c1_i32 = arith.constant 1 : i32
    %0 = arith.muli %arg1, %c1_i32 : i32
    %c1_i32_0 = arith.constant 1 : i32
    %1 = arith.addi %0, %c1_i32_0 : i32
    %c0_i32 = arith.constant 0 : i32
    %c0_i32_1 = arith.constant 0 : i32
    %c0_i32_2 = arith.constant 0 : i32
    %c0_i32_3 = arith.constant 0 : i32
    return %arg0, %1, %c0_i32, %c0_i32_1, %c0_i32_2 : i32, i32, i32, i32, i32
  }
  func.func @transform_2(%arg0: i32, %arg1: i32) -> (i32, i32, i32, i32, i32) {
    %c1_i32 = arith.constant 1 : i32
    %0 = arith.muli %arg1, %c1_i32 : i32
    %c2_i32 = arith.constant 2 : i32
    %1 = arith.addi %0, %c2_i32 : i32
    %c0_i32 = arith.constant 0 : i32
    %c0_i32_0 = arith.constant 0 : i32
    %c0_i32_1 = arith.constant 0 : i32
    %c0_i32_2 = arith.constant 0 : i32
    return %arg0, %1, %c0_i32, %c0_i32_0, %c0_i32_1 : i32, i32, i32, i32, i32
  }
  func.func @transform_3(%arg0: i32, %arg1: i32) -> (i32, i32) {
    %c0_i32 = arith.constant 0 : i32
    %c0_i32_0 = arith.constant 0 : i32
    %c0_i32_1 = arith.constant 0 : i32
    return %c0_i32, %c0_i32_0 : i32, i32
  }
  func.func @transform_4(%arg0: i32, %arg1: i32) -> (i32, i32) {
    %c0_i32 = arith.constant 0 : i32
    %c0_i32_0 = arith.constant 0 : i32
    %c0_i32_1 = arith.constant 0 : i32
    return %c0_i32, %c0_i32_0 : i32, i32
  }
  func.func @transform_5(%arg0: i32, %arg1: i32) -> (i32, i32, i32, i32) {
    %c0_i32 = arith.constant 0 : i32
    %c0_i32_0 = arith.constant 0 : i32
    %c0_i32_1 = arith.constant 0 : i32
    return %arg0, %arg1, %c0_i32, %c0_i32_0 : i32, i32, i32, i32
  }
}

</mosaic_0001>

<llo_original>
// kernel: depthwise_conv3d.1
$region0: #{depthwise_conv3d.1}
  #allocation0 [shape = 'u32[]', space=smem, size = 0x4, offset = 0x4, fixed_abs, tag = 'smem constant byte address 0x4 - core index']
  #allocation1 [shape = 'u32[144,128]{1,0:T(1,128)}', space=vmem, size = 0x12000, scoped, tag = 'internal scratch']
  %s0 = inlined_call_operand.vmem [shape: f32[2,10,1,18,72], index: 0, kind: input, shape index: {}, may-alias: {0,1,2}]
  %s1 = inlined_call_operand.vmem [shape: f32[2,10,1,18,72], index: 1, kind: input, shape index: {}, may-alias: {0,1,2}]
  %s2 = inlined_call_operand.vmem [shape: f32[2,10,1,18,72], index: 2, kind: input, shape index: {}, may-alias: {0,1,2}]
  %s3 = inlined_call_operand.vmem [shape: f32[27,64], index: 3, kind: input, shape index: {}]
  %s4 = inlined_call_operand.vmem [shape: f32[1,64], index: 4, kind: input, shape index: {}]
  %s5 = inlined_call_operand.vmem [shape: f32[2,8,16,64], index: 5, kind: output, shape index: {}]
  %s6 = sld [smem:[#allocation0]]
  $region53: #{depthwise_conv3d.1} parent=0
    _
  %s8 = ssub.s32 1, %s6
  %s9 = scalar_select 0, %s8, %s6
  loop: start=0, step=1, limit=18
  $region2: #{depthwise_conv3d.1} parent=0 // loop_pre_header
    _
  $region3: #{depthwise_conv3d.1} parent=0 // loop_header
    %s11 = sphi 0, %s15
    %p12 = scmp.ge.s32.totalorder %s11, 18
    %s18 = sphi 0, %s30
    %s19 = sphi 0, %s26
    %s20 = sphi 0, %s18
    %s21 = sphi 0, %s19
    %s22 = sphi 0, %s20
    %s23 = sphi 0, %s21
    %s35 = sphi 0, %s37
    %s38 = sphi 0, %s35
    %s39 = sphi 0, %s38
    %s55 = sphi 0, %s39
    %s65 = sphi 0, %s67
    %s68 = sphi 0, %s65
    %s69 = sphi 0, %s68
    %s85 = sphi 0, %s69
    %s95 = sphi 0, %s97
    %s98 = sphi 0, %s95
    %s99 = sphi 0, %s98
    %s115 = sphi 0, %s99
    %s119 = sphi 0, %s119
    %s121 = sphi 0, %s119
    %s122 = sphi 0, %s121
    %s136 = sphi 0, %s122
    %s140 = sphi 0, %s140
    %s142 = sphi 0, %s140
    %s143 = sphi 0, %s142
    %s157 = sphi 0, %s143
    %s165 = sphi 0, %s167
    %s168 = sphi 0, %s165
    %s169 = sphi 0, %s168
    %s185 = sphi 0, %s169
  $region4: #{depthwise_conv3d.1} parent=0 // loop_header_branch
    %14 = sbr.rel (%p12) target = $region8
  $region5: #{depthwise_conv3d.1} parent=0 // loop_body
    %s16 = ssub.s32 %s11, 1
    %s17 = ssub.s32 %s11, 2
    %s24 = sadd.s32 1, %s19
    %p25 = scmp.ge.s32.totalorder %s24, 8
    %s26 = scalar_select %p25, 0, %s24
    %s27 = sadd.s32 1, %s18
    %s28 = scalar_select %p25, %s27, %s18
    %p29 = scmp.ge.s32.totalorder %s28, 2
    %s30 = scalar_select %p29, 0, %s28
    %s31 = ssub.s32 %s18, %s30
    %s32 = ssub.s32 %s19, %s26
    %s33 = sor.u32 %s31, %s32
    %p34 = scmp.eq.s32.totalorder %s33, 0
    %s36 = sadd.s32 %s35, 1
    %s37 = scalar_select %p34, %s35, %s36
    %p40 = pneg %p34
    %p41 = scmp.eq.s32.totalorder %s11, 15
    %p42 = por %p40, %p41
    %p43 = scmp.ne.s32.totalorder %s35, %s38
    %p44 = scmp.eq.s32.totalorder %s11, 0
    %p45 = por %p43, %p44
    %p46 = scmp.ne.s32.totalorder %s35, %s38
    %p47 = scmp.eq.s32.totalorder %s16, 15
    %p48 = por %p46, %p47
    %p49 = scmp.ne.s32.totalorder %s38, %s39
    %p50 = scmp.eq.s32.totalorder %s16, 0
    %p51 = por %p49, %p50
    %p52 = scmp.ne.s32.totalorder %s38, %s39
    %p53 = scmp.eq.s32.totalorder %s17, 15
    %p54 = por %p52, %p53
    %p56 = scmp.ne.s32.totalorder %s39, %s55
    %p57 = scmp.eq.s32.totalorder %s17, 0
    %p58 = por %p56, %p57
    %s59 = sadd.s32 %s19, 1
    %s60 = sadd.s32 %s26, 1
    %s61 = ssub.s32 %s18, %s30
    %s62 = ssub.s32 %s59, %s60
    %s63 = sor.u32 %s61, %s62
    %p64 = scmp.eq.s32.totalorder %s63, 0
    %s66 = sadd.s32 %s65, 1
    %s67 = scalar_select %p64, %s65, %s66
    %p70 = pneg %p64
    %p71 = scmp.eq.s32.totalorder %s11, 15
    %p72 = por %p70, %p71
    %p73 = scmp.ne.s32.totalorder %s65, %s68
    %p74 = scmp.eq.s32.totalorder %s11, 0
    %p75 = por %p73, %p74
    %p76 = scmp.ne.s32.totalorder %s65, %s68
    %p77 = scmp.eq.s32.totalorder %s16, 15
    %p78 = por %p76, %p77
    %p79 = scmp.ne.s32.totalorder %s68, %s69
    %p80 = scmp.eq.s32.totalorder %s16, 0
    %p81 = por %p79, %p80
    %p82 = scmp.ne.s32.totalorder %s68, %s69
    %p83 = scmp.eq.s32.totalorder %s17, 15
    %p84 = por %p82, %p83
    %p86 = scmp.ne.s32.totalorder %s69, %s85
    %p87 = scmp.eq.s32.totalorder %s17, 0
    %p88 = por %p86, %p87
    %s89 = sadd.s32 %s19, 2
    %s90 = sadd.s32 %s26, 2
    %s91 = ssub.s32 %s18, %s30
    %s92 = ssub.s32 %s89, %s90
    %s93 = sor.u32 %s91, %s92
    %p94 = scmp.eq.s32.totalorder %s93, 0
    %s96 = sadd.s32 %s95, 1
    %s97 = scalar_select %p94, %s95, %s96
    %p100 = pneg %p94
    %p101 = scmp.eq.s32.totalorder %s11, 15
    %p102 = por %p100, %p101
    %p103 = scmp.ne.s32.totalorder %s95, %s98
    %p104 = scmp.eq.s32.totalorder %s11, 0
    %p105 = por %p103, %p104
    %p106 = scmp.ne.s32.totalorder %s95, %s98
    %p107 = scmp.eq.s32.totalorder %s16, 15
    %p108 = por %p106, %p107
    %p109 = scmp.ne.s32.totalorder %s98, %s99
    %p110 = scmp.eq.s32.totalorder %s16, 0
    %p111 = por %p109, %p110
    %p112 = scmp.ne.s32.totalorder %s98, %s99
    %p113 = scmp.eq.s32.totalorder %s17, 15
    %p114 = por %p112, %p113
    %p116 = scmp.ne.s32.totalorder %s99, %s115
    %p117 = scmp.eq.s32.totalorder %s17, 0
    %p118 = por %p116, %p117
    %s120 = sadd.s32 %s119, 1
    %p123 = scmp.eq.s32.totalorder %s11, 15
    %p124 = scmp.ne.s32.totalorder %s119, %s121
    %p125 = scmp.eq.s32.totalorder %s11, 0
    %p126 = por %p124, %p125
    %p127 = scmp.ne.s32.totalorder %s119, %s121
    %p128 = scmp.eq.s32.totalorder %s16, 15
    %p129 = por %p127, %p128
    %p130 = scmp.ne.s32.totalorder %s121, %s122
    %p131 = scmp.eq.s32.totalorder %s16, 0
    %p132 = por %p130, %p131
    %p133 = scmp.ne.s32.totalorder %s121, %s122
    %p134 = scmp.eq.s32.totalorder %s17, 15
    %p135 = por %p133, %p134
    %p137 = scmp.ne.s32.totalorder %s122, %s136
    %p138 = scmp.eq.s32.totalorder %s17, 0
    %p139 = por %p137, %p138
    %s141 = sadd.s32 %s140, 1
    %p144 = scmp.eq.s32.totalorder %s11, 15
    %p145 = scmp.ne.s32.totalorder %s140, %s142
    %p146 = scmp.eq.s32.totalorder %s11, 0
    %p147 = por %p145, %p146
    %p148 = scmp.ne.s32.totalorder %s140, %s142
    %p149 = scmp.eq.s32.totalorder %s16, 15
    %p150 = por %p148, %p149
    %p151 = scmp.ne.s32.totalorder %s142, %s143
    %p152 = scmp.eq.s32.totalorder %s16, 0
    %p153 = por %p151, %p152
    %p154 = scmp.ne.s32.totalorder %s142, %s143
    %p155 = scmp.eq.s32.totalorder %s17, 15
    %p156 = por %p154, %p155
    %p158 = scmp.ne.s32.totalorder %s143, %s157
    %p159 = scmp.eq.s32.totalorder %s17, 0
    %p160 = por %p158, %p159
    %s161 = ssub.s32 %s18, %s30
    %s162 = ssub.s32 %s19, %s26
    %s163 = sor.u32 %s161, %s162
    %p164 = scmp.eq.s32.totalorder %s163, 0
    %s166 = sadd.s32 %s165, 1
    %s167 = scalar_select %p164, %s165, %s166
    %p170 = pneg %p164
    %p171 = scmp.eq.s32.totalorder %s11, 15
    %p172 = por %p170, %p171
    %p173 = scmp.ne.s32.totalorder %s165, %s168
    %p174 = scmp.eq.s32.totalorder %s11, 0
    %p175 = por %p173, %p174
    %p176 = scmp.ne.s32.totalorder %s165, %s168
    %p177 = scmp.eq.s32.totalorder %s16, 15
    %p178 = por %p176, %p177
    %p179 = scmp.ne.s32.totalorder %s168, %s169
    %p180 = scmp.eq.s32.totalorder %s16, 0
    %p181 = por %p179, %p180
    %p182 = scmp.ne.s32.totalorder %s168, %s169
    %p183 = scmp.eq.s32.totalorder %s17, 15
    %p184 = por %p182, %p183
    %p186 = scmp.ne.s32.totalorder %s169, %s185
    %p187 = scmp.eq.s32.totalorder %s17, 0
    %p188 = por %p186, %p187
    %p189 = scmp.le.s32.totalorder 1, %s11
    %p190 = scmp.lt.s32.totalorder %s11, 17
    %p191 = pnand %p189, %p190
    %p192 = pneg %p191
    // Predicated region
    $region9: #{depthwise_conv3d.1} parent=5 // pred_check
      _
    $region10: #{depthwise_conv3d.1} parent=5 // pred_check_branch
      %194 = sbr.rel (%p191) target = $region12
    $region11: #{depthwise_conv3d.1} parent=5 // pred_region
      %s195 = ssub.s32 %s11, 1
      // Predicated region
      $region13: #{depthwise_conv3d.1} parent=11 // pred_check
        %p196 = pneg %p132
      $region14: #{depthwise_conv3d.1} parent=11 // pred_check_branch
        %198 = sbr.rel (%p196) target = $region16
      $region15: #{depthwise_conv3d.1} parent=11 // pred_region
        _
      $region16: #{depthwise_conv3d.1} parent=11 // pred_fallthru
        _
      // Predicated region
      $region17: #{depthwise_conv3d.1} parent=11 // pred_check
        %p199 = pneg %p153
      $region18: #{depthwise_conv3d.1} parent=11 // pred_check_branch
        %201 = sbr.rel (%p199) target = $region20
      $region19: #{depthwise_conv3d.1} parent=11 // pred_region
        _
      $region20: #{depthwise_conv3d.1} parent=11 // pred_fallthru
        _
    $region12: #{depthwise_conv3d.1} parent=5 // pred_fallthru
      _
    %p202 = scmp.lt.s32.totalorder %s11, 16
    // Predicated region
    $region21: #{depthwise_conv3d.1} parent=5 // pred_check
      %p203 = pneg %p202
    $region22: #{depthwise_conv3d.1} parent=5 // pred_check_branch
      %205 = sbr.rel (%p203) target = $region24
    $region23: #{depthwise_conv3d.1} parent=5 // pred_region
      // Predicated region
      $region25: #{depthwise_conv3d.1} parent=23 // pred_check
        %p206 = pneg %p45
      $region26: #{depthwise_conv3d.1} parent=23 // pred_check_branch
        %208 = sbr.rel (%p206) target = $region28
      $region27: #{depthwise_conv3d.1} parent=23 // pred_region
        %p209 = scmp.lt.s32.totalorder %s18, 1
        %s210 = scalar_select %p209, %s18, 1
        %p211 = scmp.lt.s32.totalorder %s19, 9
        %s212 = scalar_select %p211, %s19, 9
        %s213 = smul.addr %s212, 3
        %s214 = smul.addr %s210, 30
        %s215 = sadd.s32 %s213, %s214
        %s216 = smul.addr %s215, 8
        %s217 = scalar_lea.vmem %s0, %s216
      $region28: #{depthwise_conv3d.1} parent=23 // pred_fallthru
        _
      // Predicated region
      $region29: #{depthwise_conv3d.1} parent=23 // pred_check
        %p218 = pneg %p75
      $region30: #{depthwise_conv3d.1} parent=23 // pred_check_branch
        %220 = sbr.rel (%p218) target = $region32
      $region31: #{depthwise_conv3d.1} parent=23 // pred_region
        %s221 = sadd.s32 %s19, 1
        %p222 = scmp.lt.s32.totalorder %s18, 1
        %s223 = scalar_select %p222, %s18, 1
        %p224 = scmp.lt.s32.totalorder %s221, 9
        %s225 = scalar_select %p224, %s221, 9
        %s226 = smul.addr %s225, 3
        %s227 = smul.addr %s223, 30
        %s228 = sadd.s32 %s226, %s227
        %s229 = smul.addr %s228, 8
        %s230 = scalar_lea.vmem %s1, %s229
        %s231 = sadd.s32 %s19, 1
      $region32: #{depthwise_conv3d.1} parent=23 // pred_fallthru
        _
      // Predicated region
      $region33: #{depthwise_conv3d.1} parent=23 // pred_check
        %p232 = pneg %p105
      $region34: #{depthwise_conv3d.1} parent=23 // pred_check_branch
        %234 = sbr.rel (%p232) target = $region36
      $region35: #{depthwise_conv3d.1} parent=23 // pred_region
        %s235 = sadd.s32 %s19, 2
        %p236 = scmp.lt.s32.totalorder %s18, 1
        %s237 = scalar_select %p236, %s18, 1
        %p238 = scmp.lt.s32.totalorder %s235, 9
        %s239 = scalar_select %p238, %s235, 9
        %s240 = smul.addr %s239, 3
        %s241 = smul.addr %s237, 30
        %s242 = sadd.s32 %s240, %s241
        %s243 = smul.addr %s242, 8
        %s244 = scalar_lea.vmem %s2, %s243
        %s245 = sadd.s32 %s19, 2
      $region36: #{depthwise_conv3d.1} parent=23 // pred_fallthru
        _
    $region24: #{depthwise_conv3d.1} parent=5 // pred_fallthru
      _
    %p246 = scmp.le.s32.totalorder 1, %s11
    %p247 = scmp.lt.s32.totalorder %s11, 17
    %p248 = pnand %p246, %p247
    %p249 = pneg %p248
    // Predicated region
    $region37: #{depthwise_conv3d.1} parent=5 // pred_check
      _
    $region38: #{depthwise_conv3d.1} parent=5 // pred_check_branch
      %251 = sbr.rel (%p248) target = $region40
    $region39: #{depthwise_conv3d.1} parent=5 // pred_region
      %s252 = ssub.s32 %s11, 1
      %p253 = scmp.lt.s32.totalorder %s20, 1
      %s254 = scalar_select %p253, %s20, 1
      %p255 = scmp.lt.s32.totalorder %s21, 9
      %s256 = scalar_select %p255, %s21, 9
      %s257 = smul.addr %s256, 3
      %s258 = smul.addr %s254, 30
      %s259 = sadd.s32 %s257, %s258
      %s260 = smul.addr %s259, 8
      %s261 = scalar_lea.vmem %s0, %s260
      %p262 = pneg %p51
      %p263 = pneg %p48
      %s264 = sadd.s32 %s21, 1
      %p265 = scmp.lt.s32.totalorder %s20, 1
      %s266 = scalar_select %p265, %s20, 1
      %p267 = scmp.lt.s32.totalorder %s264, 9
      %s268 = scalar_select %p267, %s264, 9
      %s269 = smul.addr %s268, 3
      %s270 = smul.addr %s266, 30
      %s271 = sadd.s32 %s269, %s270
      %s272 = smul.addr %s271, 8
      %s273 = scalar_lea.vmem %s1, %s272
      %p274 = pneg %p81
      %p275 = pneg %p78
      %s276 = sadd.s32 %s21, 2
      %p277 = scmp.lt.s32.totalorder %s20, 1
      %s278 = scalar_select %p277, %s20, 1
      %p279 = scmp.lt.s32.totalorder %s276, 9
      %s280 = scalar_select %p279, %s276, 9
      %s281 = smul.addr %s280, 3
      %s282 = smul.addr %s278, 30
      %s283 = sadd.s32 %s281, %s282
      %s284 = smul.addr %s283, 8
      %s285 = scalar_lea.vmem %s2, %s284
      %p286 = pneg %p111
      %p287 = pneg %p108
      %p288 = pneg %p132
      %p289 = pneg %p129
      %p290 = pneg %p153
      %p291 = pneg %p150
      %p292 = pneg %p181
      %p293 = pneg %p178
      %p294 = scmp.lt.s32.totalorder %s20, 1
      %s295 = scalar_select %p294, %s20, 1
      %p296 = scmp.lt.s32.totalorder %s21, 7
      %s297 = scalar_select %p296, %s21, 7
      %s298 = smul.addr %s297, 2
      %s299 = smul.addr %s295, 16
      %s300 = sadd.s32 %s298, %s299
      %s301 = smul.addr %s300, 8
      %s302 = scalar_lea.vmem %s5, %s301
      %p303 = scmp.lt.s32.totalorder %s20, 1
      %s304 = scalar_select %p303, %s20, 1
      %p305 = scmp.lt.s32.totalorder %s21, 9
      %s306 = scalar_select %p305, %s21, 9
      %s307 = smul.addr %s306, 3
      %s308 = smul.addr %s304, 30
      %s309 = sadd.s32 %s307, %s308
      %s310 = smul.addr %s309, 8
      %s311 = scalar_lea.vmem %s0, %s310
      %s312 = sadd.s32 %s21, 1
      %p313 = scmp.lt.s32.totalorder %s20, 1
      %s314 = scalar_select %p313, %s20, 1
      %p315 = scmp.lt.s32.totalorder %s312, 9
      %s316 = scalar_select %p315, %s312, 9
      %s317 = smul.addr %s316, 3
      %s318 = smul.addr %s314, 30
      %s319 = sadd.s32 %s317, %s318
      %s320 = smul.addr %s319, 8
      %s321 = scalar_lea.vmem %s1, %s320
      %s322 = sadd.s32 %s21, 1
      %s323 = sadd.s32 %s21, 2
      %p324 = scmp.lt.s32.totalorder %s20, 1
      %s325 = scalar_select %p324, %s20, 1
      %p326 = scmp.lt.s32.totalorder %s323, 9
      %s327 = scalar_select %p326, %s323, 9
      %s328 = smul.addr %s327, 3
      %s329 = smul.addr %s325, 30
      %s330 = sadd.s32 %s328, %s329
      %s331 = smul.addr %s330, 8
      %s332 = scalar_lea.vmem %s2, %s331
      %s333 = sadd.s32 %s21, 2
      %p334 = scmp.lt.s32.totalorder %s20, 1
      %s335 = scalar_select %p334, %s20, 1
      %p336 = scmp.lt.s32.totalorder %s21, 7
      %s337 = scalar_select %p336, %s21, 7
      %s338 = smul.addr %s337, 2
      %s339 = smul.addr %s335, 16
      %s340 = sadd.s32 %s338, %s339
      %s341 = smul.addr %s340, 8
      %s342 = scalar_lea.vmem %s5, %s341
      %v343 = vld [vmem:[%s311] sm:$0xff]
      %v344 = vld [vmem:[%s311 + $0x8] sm:$0xff]
      %v345 = vld [vmem:[%s3] sm:$0x1]
      %v346 = vlaneseq
      %v347 = vshrl.u32 %v346, 7
      %v348 = vsub.s32 0, %v347
      %v349 = vrot.slane %v345, %v348
      %v350 = vmul.f32 %v343, %v349
      %v351 = vmul.f32 %v344, %v349
      %v352 = vadd.f32 %v350, 0.0
      %v353 = vadd.f32 %v351, 0.0
      %v354 = vld [vmem:[%s3 + $0x1] sm:$0x1]
      %v355 = vlaneseq
      %v356 = vshrl.u32 %v355, 7
      %v357 = vsub.s32 0, %v356
      %v358 = vrot.slane %v354, %v357
      %360 = vrot.lane.b32.xlu0 %v358, 4
      %v361 = vpop.permute.xlu0 %360
      %v363 = vmul.f32 %v343, %v361
      %v364 = vmul.f32 %v344, %v361
      %367 = vrot.lane.b32.xlu0 %v363, 124
      %v368 = vpop.permute.xlu0 %367
      %369 = vrot.lane.b32.xlu0 %v364, 124
      %v370 = vpop.permute.xlu0 %369
      %v373 = vadd.f32 %v352, %v368
      %v374 = vadd.f32 %v353, %v370
      %v375 = vld [vmem:[%s3 + $0x2] sm:$0x1]
      %v376 = vlaneseq
      %v377 = vshrl.u32 %v376, 7
      %v378 = vsub.s32 0, %v377
      %v379 = vrot.slane %v375, %v378
      %381 = vrot.lane.b32.xlu0 %v379, 8
      %v382 = vpop.permute.xlu0 %381
      %v384 = vmul.f32 %v343, %v382
      %v385 = vmul.f32 %v344, %v382
      %388 = vrot.lane.b32.xlu0 %v384, 120
      %v389 = vpop.permute.xlu0 %388
      %390 = vrot.lane.b32.xlu0 %v385, 120
      %v391 = vpop.permute.xlu0 %390
      %v394 = vadd.f32 %v373, %v389
      %v395 = vadd.f32 %v374, %v391
      %v396 = vld [vmem:[%s311 + $0x1] sm:$0xff]
      %v397 = vld [vmem:[%s311 + $0x9] sm:$0xff]
      %v398 = vld [vmem:[%s3 + $0x3] sm:$0x1]
      %v399 = vlaneseq
      %v400 = vshrl.u32 %v399, 7
      %v401 = vsub.s32 0, %v400
      %v402 = vrot.slane %v398, %v401
      %v403 = vmul.f32 %v396, %v402
      %v404 = vmul.f32 %v397, %v402
      %v405 = vadd.f32 %v394, %v403
      %v406 = vadd.f32 %v395, %v404
      %v407 = vld [vmem:[%s3 + $0x4] sm:$0x1]
      %v408 = vlaneseq
      %v409 = vshrl.u32 %v408, 7
      %v410 = vsub.s32 0, %v409
      %v411 = vrot.slane %v407, %v410
      %413 = vrot.lane.b32.xlu0 %v411, 4
      %v414 = vpop.permute.xlu0 %413
      %v416 = vmul.f32 %v396, %v414
      %v417 = vmul.f32 %v397, %v414
      %420 = vrot.lane.b32.xlu0 %v416, 124
      %v421 = vpop.permute.xlu0 %420
      %422 = vrot.lane.b32.xlu0 %v417, 124
      %v423 = vpop.permute.xlu0 %422
      %v426 = vadd.f32 %v405, %v421
      %v427 = vadd.f32 %v406, %v423
      %v428 = vld [vmem:[%s3 + $0x5] sm:$0x1]
      %v429 = vlaneseq
      %v430 = vshrl.u32 %v429, 7
      %v431 = vsub.s32 0, %v430
      %v432 = vrot.slane %v428, %v431
      %434 = vrot.lane.b32.xlu0 %v432, 8
      %v435 = vpop.permute.xlu0 %434
      %v437 = vmul.f32 %v396, %v435
      %v438 = vmul.f32 %v397, %v435
      %441 = vrot.lane.b32.xlu0 %v437, 120
      %v442 = vpop.permute.xlu0 %441
      %443 = vrot.lane.b32.xlu0 %v438, 120
      %v444 = vpop.permute.xlu0 %443
      %v447 = vadd.f32 %v426, %v442
      %v448 = vadd.f32 %v427, %v444
      %v449 = vld [vmem:[%s311 + $0x2] sm:$0xff]
      %v450 = vld [vmem:[%s311 + $0xa] sm:$0xff]
      %v451 = vld [vmem:[%s3 + $0x6] sm:$0x1]
      %v452 = vlaneseq
      %v453 = vshrl.u32 %v452, 7
      %v454 = vsub.s32 0, %v453
      %v455 = vrot.slane %v451, %v454
      %v456 = vmul.f32 %v449, %v455
      %v457 = vmul.f32 %v450, %v455
      %v458 = vadd.f32 %v447, %v456
      %v459 = vadd.f32 %v448, %v457
      %v460 = vld [vmem:[%s3 + $0x7] sm:$0x1]
      %v461 = vlaneseq
      %v462 = vshrl.u32 %v461, 7
      %v463 = vsub.s32 0, %v462
      %v464 = vrot.slane %v460, %v463
      %466 = vrot.lane.b32.xlu0 %v464, 4
      %v467 = vpop.permute.xlu0 %466
      %v469 = vmul.f32 %v449, %v467
      %v470 = vmul.f32 %v450, %v467
      %473 = vrot.lane.b32.xlu0 %v469, 124
      %v474 = vpop.permute.xlu0 %473
      %475 = vrot.lane.b32.xlu0 %v470, 124
      %v476 = vpop.permute.xlu0 %475
      %v479 = vadd.f32 %v458, %v474
      %v480 = vadd.f32 %v459, %v476
      %v481 = vld [vmem:[%s3 + $0x8] sm:$0x1]
      %v482 = vlaneseq
      %v483 = vshrl.u32 %v482, 7
      %v484 = vsub.s32 0, %v483
      %v485 = vrot.slane %v481, %v484
      %487 = vrot.lane.b32.xlu0 %v485, 8
      %v488 = vpop.permute.xlu0 %487
      %v490 = vmul.f32 %v449, %v488
      %v491 = vmul.f32 %v450, %v488
      %494 = vrot.lane.b32.xlu0 %v490, 120
      %v495 = vpop.permute.xlu0 %494
      %496 = vrot.lane.b32.xlu0 %v491, 120
      %v497 = vpop.permute.xlu0 %496
      %v500 = vadd.f32 %v479, %v495
      %v501 = vadd.f32 %v480, %v497
      %v502 = vld [vmem:[%s321] sm:$0xff]
      %v503 = vld [vmem:[%s321 + $0x8] sm:$0xff]
      %v504 = vld [vmem:[%s3 + $0x9] sm:$0x1]
      %v505 = vlaneseq
      %v506 = vshrl.u32 %v505, 7
      %v507 = vsub.s32 0, %v506
      %v508 = vrot.slane %v504, %v507
      %v509 = vmul.f32 %v502, %v508
      %v510 = vmul.f32 %v503, %v508
      %v511 = vadd.f32 %v500, %v509
      %v512 = vadd.f32 %v501, %v510
      %v513 = vld [vmem:[%s3 + $0xa] sm:$0x1]
      %v514 = vlaneseq
      %v515 = vshrl.u32 %v514, 7
      %v516 = vsub.s32 0, %v515
      %v517 = vrot.slane %v513, %v516
      %519 = vrot.lane.b32.xlu0 %v517, 4
      %v520 = vpop.permute.xlu0 %519
      %v522 = vmul.f32 %v502, %v520
      %v523 = vmul.f32 %v503, %v520
      %526 = vrot.lane.b32.xlu0 %v522, 124
      %v527 = vpop.permute.xlu0 %526
      %528 = vrot.lane.b32.xlu0 %v523, 124
      %v529 = vpop.permute.xlu0 %528
      %v532 = vadd.f32 %v511, %v527
      %v533 = vadd.f32 %v512, %v529
      %v534 = vld [vmem:[%s3 + $0xb] sm:$0x1]
      %v535 = vlaneseq
      %v536 = vshrl.u32 %v535, 7
      %v537 = vsub.s32 0, %v536
      %v538 = vrot.slane %v534, %v537
      %540 = vrot.lane.b32.xlu0 %v538, 8
      %v541 = vpop.permute.xlu0 %540
      %v543 = vmul.f32 %v502, %v541
      %v544 = vmul.f32 %v503, %v541
      %547 = vrot.lane.b32.xlu0 %v543, 120
      %v548 = vpop.permute.xlu0 %547
      %549 = vrot.lane.b32.xlu0 %v544, 120
      %v550 = vpop.permute.xlu0 %549
      %v553 = vadd.f32 %v532, %v548
      %v554 = vadd.f32 %v533, %v550
      %v555 = vld [vmem:[%s321 + $0x1] sm:$0xff]
      %v556 = vld [vmem:[%s321 + $0x9] sm:$0xff]
      %v557 = vld [vmem:[%s3 + $0xc] sm:$0x1]
      %v558 = vlaneseq
      %v559 = vshrl.u32 %v558, 7
      %v560 = vsub.s32 0, %v559
      %v561 = vrot.slane %v557, %v560
      %v562 = vmul.f32 %v555, %v561
      %v563 = vmul.f32 %v556, %v561
      %v564 = vadd.f32 %v553, %v562
      %v565 = vadd.f32 %v554, %v563
      %v566 = vld [vmem:[%s3 + $0xd] sm:$0x1]
      %v567 = vlaneseq
      %v568 = vshrl.u32 %v567, 7
      %v569 = vsub.s32 0, %v568
      %v570 = vrot.slane %v566, %v569
      %572 = vrot.lane.b32.xlu0 %v570, 4
      %v573 = vpop.permute.xlu0 %572
      %v575 = vmul.f32 %v555, %v573
      %v576 = vmul.f32 %v556, %v573
      %579 = vrot.lane.b32.xlu0 %v575, 124
      %v580 = vpop.permute.xlu0 %579
      %581 = vrot.lane.b32.xlu0 %v576, 124
      %v582 = vpop.permute.xlu0 %581
      %v585 = vadd.f32 %v564, %v580
      %v586 = vadd.f32 %v565, %v582
      %v587 = vld [vmem:[%s3 + $0xe] sm:$0x1]
      %v588 = vlaneseq
      %v589 = vshrl.u32 %v588, 7
      %v590 = vsub.s32 0, %v589
      %v591 = vrot.slane %v587, %v590
      %593 = vrot.lane.b32.xlu0 %v591, 8
      %v594 = vpop.permute.xlu0 %593
      %v596 = vmul.f32 %v555, %v594
      %v597 = vmul.f32 %v556, %v594
      %600 = vrot.lane.b32.xlu0 %v596, 120
      %v601 = vpop.permute.xlu0 %600
      %602 = vrot.lane.b32.xlu0 %v597, 120
      %v603 = vpop.permute.xlu0 %602
      %v606 = vadd.f32 %v585, %v601
      %v607 = vadd.f32 %v586, %v603
      %v608 = vld [vmem:[%s321 + $0x2] sm:$0xff]
      %v609 = vld [vmem:[%s321 + $0xa] sm:$0xff]
      %v610 = vld [vmem:[%s3 + $0xf] sm:$0x1]
      %v611 = vlaneseq
      %v612 = vshrl.u32 %v611, 7
      %v613 = vsub.s32 0, %v612
      %v614 = vrot.slane %v610, %v613
      %v615 = vmul.f32 %v608, %v614
      %v616 = vmul.f32 %v609, %v614
      %v617 = vadd.f32 %v606, %v615
      %v618 = vadd.f32 %v607, %v616
      %v619 = vld [vmem:[%s3 + $0x10] sm:$0x1]
      %v620 = vlaneseq
      %v621 = vshrl.u32 %v620, 7
      %v622 = vsub.s32 0, %v621
      %v623 = vrot.slane %v619, %v622
      %625 = vrot.lane.b32.xlu0 %v623, 4
      %v626 = vpop.permute.xlu0 %625
      %v628 = vmul.f32 %v608, %v626
      %v629 = vmul.f32 %v609, %v626
      %632 = vrot.lane.b32.xlu0 %v628, 124
      %v633 = vpop.permute.xlu0 %632
      %634 = vrot.lane.b32.xlu0 %v629, 124
      %v635 = vpop.permute.xlu0 %634
      %v638 = vadd.f32 %v617, %v633
      %v639 = vadd.f32 %v618, %v635
      %v640 = vld [vmem:[%s3 + $0x11] sm:$0x1]
      %v641 = vlaneseq
      %v642 = vshrl.u32 %v641, 7
      %v643 = vsub.s32 0, %v642
      %v644 = vrot.slane %v640, %v643
      %646 = vrot.lane.b32.xlu0 %v644, 8
      %v647 = vpop.permute.xlu0 %646
      %v649 = vmul.f32 %v608, %v647
      %v650 = vmul.f32 %v609, %v647
      %653 = vrot.lane.b32.xlu0 %v649, 120
      %v654 = vpop.permute.xlu0 %653
      %655 = vrot.lane.b32.xlu0 %v650, 120
      %v656 = vpop.permute.xlu0 %655
      %v659 = vadd.f32 %v638, %v654
      %v660 = vadd.f32 %v639, %v656
      %v661 = vld [vmem:[%s332] sm:$0xff]
      %v662 = vld [vmem:[%s332 + $0x8] sm:$0xff]
      %v663 = vld [vmem:[%s3 + $0x12] sm:$0x1]
      %v664 = vlaneseq
      %v665 = vshrl.u32 %v664, 7
      %v666 = vsub.s32 0, %v665
      %v667 = vrot.slane %v663, %v666
      %v668 = vmul.f32 %v661, %v667
      %v669 = vmul.f32 %v662, %v667
      %v670 = vadd.f32 %v659, %v668
      %v671 = vadd.f32 %v660, %v669
      %v672 = vld [vmem:[%s3 + $0x13] sm:$0x1]
      %v673 = vlaneseq
      %v674 = vshrl.u32 %v673, 7
      %v675 = vsub.s32 0, %v674
      %v676 = vrot.slane %v672, %v675
      %678 = vrot.lane.b32.xlu0 %v676, 4
      %v679 = vpop.permute.xlu0 %678
      %v681 = vmul.f32 %v661, %v679
      %v682 = vmul.f32 %v662, %v679
      %685 = vrot.lane.b32.xlu0 %v681, 124
      %v686 = vpop.permute.xlu0 %685
      %687 = vrot.lane.b32.xlu0 %v682, 124
      %v688 = vpop.permute.xlu0 %687
      %v691 = vadd.f32 %v670, %v686
      %v692 = vadd.f32 %v671, %v688
      %v693 = vld [vmem:[%s3 + $0x14] sm:$0x1]
      %v694 = vlaneseq
      %v695 = vshrl.u32 %v694, 7
      %v696 = vsub.s32 0, %v695
      %v697 = vrot.slane %v693, %v696
      %699 = vrot.lane.b32.xlu0 %v697, 8
      %v700 = vpop.permute.xlu0 %699
      %v702 = vmul.f32 %v661, %v700
      %v703 = vmul.f32 %v662, %v700
      %706 = vrot.lane.b32.xlu0 %v702, 120
      %v707 = vpop.permute.xlu0 %706
      %708 = vrot.lane.b32.xlu0 %v703, 120
      %v709 = vpop.permute.xlu0 %708
      %v712 = vadd.f32 %v691, %v707
      %v713 = vadd.f32 %v692, %v709
      %v714 = vld [vmem:[%s332 + $0x1] sm:$0xff]
      %v715 = vld [vmem:[%s332 + $0x9] sm:$0xff]
      %v716 = vld [vmem:[%s3 + $0x15] sm:$0x1]
      %v717 = vlaneseq
      %v718 = vshrl.u32 %v717, 7
      %v719 = vsub.s32 0, %v718
      %v720 = vrot.slane %v716, %v719
      %v721 = vmul.f32 %v714, %v720
      %v722 = vmul.f32 %v715, %v720
      %v723 = vadd.f32 %v712, %v721
      %v724 = vadd.f32 %v713, %v722
      %v725 = vld [vmem:[%s3 + $0x16] sm:$0x1]
      %v726 = vlaneseq
      %v727 = vshrl.u32 %v726, 7
      %v728 = vsub.s32 0, %v727
      %v729 = vrot.slane %v725, %v728
      %731 = vrot.lane.b32.xlu0 %v729, 4
      %v732 = vpop.permute.xlu0 %731
      %v734 = vmul.f32 %v714, %v732
      %v735 = vmul.f32 %v715, %v732
      %738 = vrot.lane.b32.xlu0 %v734, 124
      %v739 = vpop.permute.xlu0 %738
      %740 = vrot.lane.b32.xlu0 %v735, 124
      %v741 = vpop.permute.xlu0 %740
      %v744 = vadd.f32 %v723, %v739
      %v745 = vadd.f32 %v724, %v741
      %v746 = vld [vmem:[%s3 + $0x17] sm:$0x1]
      %v747 = vlaneseq
      %v748 = vshrl.u32 %v747, 7
      %v749 = vsub.s32 0, %v748
      %v750 = vrot.slane %v746, %v749
      %752 = vrot.lane.b32.xlu0 %v750, 8
      %v753 = vpop.permute.xlu0 %752
      %v755 = vmul.f32 %v714, %v753
      %v756 = vmul.f32 %v715, %v753
      %759 = vrot.lane.b32.xlu0 %v755, 120
      %v760 = vpop.permute.xlu0 %759
      %761 = vrot.lane.b32.xlu0 %v756, 120
      %v762 = vpop.permute.xlu0 %761
      %v765 = vadd.f32 %v744, %v760
      %v766 = vadd.f32 %v745, %v762
      %v767 = vld [vmem:[%s332 + $0x2] sm:$0xff]
      %v768 = vld [vmem:[%s332 + $0xa] sm:$0xff]
      %v769 = vld [vmem:[%s3 + $0x18] sm:$0x1]
      %v770 = vlaneseq
      %v771 = vshrl.u32 %v770, 7
      %v772 = vsub.s32 0, %v771
      %v773 = vrot.slane %v769, %v772
      %v774 = vmul.f32 %v767, %v773
      %v775 = vmul.f32 %v768, %v773
      %v776 = vadd.f32 %v765, %v774
      %v777 = vadd.f32 %v766, %v775
      %v778 = vld [vmem:[%s3 + $0x19] sm:$0x1]
      %v779 = vlaneseq
      %v780 = vshrl.u32 %v779, 7
      %v781 = vsub.s32 0, %v780
      %v782 = vrot.slane %v778, %v781
      %784 = vrot.lane.b32.xlu0 %v782, 4
      %v785 = vpop.permute.xlu0 %784
      %v787 = vmul.f32 %v767, %v785
      %v788 = vmul.f32 %v768, %v785
      %791 = vrot.lane.b32.xlu0 %v787, 124
      %v792 = vpop.permute.xlu0 %791
      %793 = vrot.lane.b32.xlu0 %v788, 124
      %v794 = vpop.permute.xlu0 %793
      %v797 = vadd.f32 %v776, %v792
      %v798 = vadd.f32 %v777, %v794
      %v799 = vld [vmem:[%s3 + $0x1a] sm:$0x1]
      %v800 = vlaneseq
      %v801 = vshrl.u32 %v800, 7
      %v802 = vsub.s32 0, %v801
      %v803 = vrot.slane %v799, %v802
      %805 = vrot.lane.b32.xlu0 %v803, 8
      %v806 = vpop.permute.xlu0 %805
      %v808 = vmul.f32 %v767, %v806
      %v809 = vmul.f32 %v768, %v806
      %812 = vrot.lane.b32.xlu0 %v808, 120
      %v813 = vpop.permute.xlu0 %812
      %814 = vrot.lane.b32.xlu0 %v809, 120
      %v815 = vpop.permute.xlu0 %814
      %v818 = vadd.f32 %v797, %v813
      %v819 = vadd.f32 %v798, %v815
      %v820 = vld [vmem:[%s4] sm:$0x1]
      %v822 = vlaneseq
      %v823 = vshrl.u32 %v822, 7
      %v824 = vsub.s32 0, %v823
      %v825 = vrot.slane %v820, %v824
      %v827 = vadd.f32 %v818, %v825
      %v828 = vadd.f32 %v819, %v825
      %vm829 = vcmask 523264
      %830 = vst.msk [vmem:[%s342] sm:$0xff] %vm829, %v827
      %831 = vst.msk [vmem:[%s342 + $0x8] sm:$0xff] %vm829, %v828
      %p832 = scmp.lt.s32.totalorder %s20, 1
      %s833 = scalar_select %p832, %s20, 1
      %p834 = scmp.lt.s32.totalorder %s21, 7
      %s835 = scalar_select %p834, %s21, 7
      %s836 = smul.addr %s835, 2
      %s837 = smul.addr %s833, 16
      %s838 = sadd.s32 %s836, %s837
      %s839 = smul.addr %s838, 8
      %s840 = scalar_lea.vmem %s5, %s839
      // Predicated region
      $region41: #{depthwise_conv3d.1} parent=39 // pred_check
        %p841 = pneg %p178
      $region42: #{depthwise_conv3d.1} parent=39 // pred_check_branch
        %843 = sbr.rel (%p841) target = $region44
      $region43: #{depthwise_conv3d.1} parent=39 // pred_region
        _
      $region44: #{depthwise_conv3d.1} parent=39 // pred_fallthru
        _
    $region40: #{depthwise_conv3d.1} parent=5 // pred_fallthru
      _
    %p844 = scmp.le.s32.totalorder 2, %s11
    // Predicated region
    $region45: #{depthwise_conv3d.1} parent=5 // pred_check
      %p845 = pneg %p844
    $region46: #{depthwise_conv3d.1} parent=5 // pred_check_branch
      %847 = sbr.rel (%p845) target = $region48
    $region47: #{depthwise_conv3d.1} parent=5 // pred_region
      %s848 = ssub.s32 %s11, 2
      // Predicated region
      $region49: #{depthwise_conv3d.1} parent=47 // pred_check
        %p849 = pneg %p184
      $region50: #{depthwise_conv3d.1} parent=47 // pred_check_branch
        %851 = sbr.rel (%p849) target = $region52
      $region51: #{depthwise_conv3d.1} parent=47 // pred_region
        %p852 = scmp.lt.s32.totalorder %s22, 1
        %s853 = scalar_select %p852, %s22, 1
        %p854 = scmp.lt.s32.totalorder %s23, 7
        %s855 = scalar_select %p854, %s23, 7
        %s856 = smul.addr %s855, 2
        %s857 = smul.addr %s853, 16
        %s858 = sadd.s32 %s856, %s857
        %s859 = smul.addr %s858, 8
        %s860 = scalar_lea.vmem %s5, %s859
      $region52: #{depthwise_conv3d.1} parent=47 // pred_fallthru
        _
    $region48: #{depthwise_conv3d.1} parent=5 // pred_fallthru
      _
  $region6: #{depthwise_conv3d.1} parent=0 // loop_footer
    %s15 = sadd.s32 1, %s11
  $region7: #{depthwise_conv3d.1} parent=0 // loop_footer_branch
    %10 = sbr.rel target = $region3
  $region8: #{depthwise_conv3d.1} parent=0 // loop_exit
    _

</llo_original>
